<compile_context>
chip_gen: v7x
topology: tpu7x:2x2x1
jax: 0.10.0
libtpu: 0.0.40
codegen_flags: <defaults>
</compile_context>

<pallas_src>
import jax
import jax.numpy as jnp
from jax.experimental import pallas as pl
from jax.experimental.pallas import tpu as pltpu

GRU_HIDDEN_SIZE = 32
NUM_CUES = 2
NUM_STIMULI = 4
INPUT_SIZE = NUM_CUES + NUM_STIMULI  # 6

LANES = 128                 # one gate per 128-lane segment
GATE_WIDTH = 3 * LANES      # 384 = [r | z | n], lane-aligned

# Packed parameter slab row layout (all rows 384 lanes wide, f32):
ROW_WI = 0                                   # rows [0:I)      : W_i (I, 384)
ROW_BIN = ROW_WI + INPUT_SIZE                # row 6           : fused input bias
ROW_BHN = ROW_BIN + 1                        # row 7           : b_hn (n segment only)
ROW_WH = ((ROW_BHN + 1 + 7) // 8) * 8        # row 8           : W_h (128, 384), rows>=H zero
ROW_FCW = ROW_WH + LANES                     # row 136         : fc weight (lanes 0:H)
ROW_FCB = ROW_FCW + 1                        # row 137         : fc bias replicated lanes 0:128
SLAB_ROWS = ((ROW_FCB + 1 + 7) // 8) * 8     # 144

_VMEM = pl.BlockSpec(memory_space=pltpu.MemorySpace.VMEM)


# ----------------------------------------------------------------------------
# One-time parameter fusion (hoisted out of the per-call path).
# ----------------------------------------------------------------------------
def prepare_params(params):
    """Pack PyTorch-convention GRU + fc parameters into one (144, 384) slab.

    Gate g of the fused weights occupies lanes [g*128, g*128 + H); lanes
    [H, 128) of every segment are zero, which keeps the padded hidden state's
    extra lanes exactly zero through the recurrence.
    """
    H = GRU_HIDDEN_SIZE
    w_ih = jnp.asarray(params["weight_ih"], jnp.float32)   # (3H, I) rows [r; z; n]
    w_hh = jnp.asarray(params["weight_hh"], jnp.float32)   # (3H, H)
    b_ih = jnp.asarray(params["bias_ih"], jnp.float32)     # (3H,)
    b_hh = jnp.asarray(params["bias_hh"], jnp.float32)     # (3H,)
    fc_w = jnp.asarray(params["fc_w"], jnp.float32)        # (1, H)
    fc_b = jnp.asarray(params["fc_b"], jnp.float32)        # (1,)
    I = w_ih.shape[1]
    assert I == INPUT_SIZE and w_hh.shape[1] == H

    slab = jnp.zeros((SLAB_ROWS, GATE_WIDTH), jnp.float32)
    for g in range(3):
        col = g * LANES
        slab = slab.at[ROW_WI:ROW_WI + I, col:col + H].set(w_ih[g * H:(g + 1) * H, :].T)
        slab = slab.at[ROW_WH:ROW_WH + H, col:col + H].set(w_hh[g * H:(g + 1) * H, :].T)

    # Input-side bias: b_ih + b_hh for r and z (fold the hidden bias off the
    # serial chain); b_ih only for n (b_hn must stay inside r * (W_hn h + b_hn)).
    slab = slab.at[ROW_BIN, 0 * LANES:0 * LANES + H].set(b_ih[0:H] + b_hh[0:H])
    slab = slab.at[ROW_BIN, 1 * LANES:1 * LANES + H].set(b_ih[H:2 * H] + b_hh[H:2 * H])
    slab = slab.at[ROW_BIN, 2 * LANES:2 * LANES + H].set(b_ih[2 * H:3 * H])
    slab = slab.at[ROW_BHN, 2 * LANES:2 * LANES + H].set(b_hh[2 * H:3 * H])

    slab = slab.at[ROW_FCW, 0:H].set(fc_w[0])
    slab = slab.at[ROW_FCB, 0:LANES].set(jnp.full((LANES,), fc_b[0], jnp.float32))
    return slab


# ----------------------------------------------------------------------------
# Kernel factory: GRU unrolled over time + exact hidden passthrough + fc score.
# The hidden state is carried as a single (B, 128) vreg row-group; all gate
# math is vreg-aligned VALU/EUP work, one MXU push per recurrent step.
# ----------------------------------------------------------------------------
def _make_gru_kernel(seq_len, batch, has_h0):
    T, B, H, L = seq_len, batch, GRU_HIDDEN_SIZE, LANES

    def kernel(*refs):
        if has_h0:
            x_ref, h0_ref, slab_ref, out_ref = refs
            h = h0_ref[...]                                   # (B, 128), lanes >= H are 0
        else:
            x_ref, slab_ref, out_ref = refs
            h = jnp.zeros((B, L), jnp.float32)

        # Static views into the packed parameter slab (zero runtime cost).
        wi = slab_ref[ROW_WI:ROW_WI + INPUT_SIZE, :]          # (I, 384)
        b_in = slab_ref[ROW_BIN:ROW_BIN + 1, :]               # (1, 384)
        bhn = slab_ref[ROW_BHN:ROW_BHN + 1, 2 * L:3 * L]      # (1, 128)
        wh = slab_ref[ROW_WH:ROW_WH + L, :]                   # (128, 384)
        fcw = slab_ref[ROW_FCW:ROW_FCW + 1, 0:L]              # (1, 128)
        fcb = slab_ref[ROW_FCB:ROW_FCB + 1, 0:L]              # (1, 128)

        # Single MXU push for the whole input projection (off the serial chain).
        gi_all = jnp.dot(x_ref[...], wi,
                         preferred_element_type=jnp.float32) + b_in   # (T*B, 384)

        # Serial recurrence, fully unrolled (T is a tiny static constant).
        for t in range(T):
            gi = gi_all[t * B:(t + 1) * B, :]                              # (B, 384)
            gh = jnp.dot(h, wh, preferred_element_type=jnp.float32)        # (B, 384)
            # r and z share one sigmoid over their adjacent 256 lanes.
            s = jax.nn.sigmoid(gi[:, :2 * L] + gh[:, :2 * L])
            r = s[:, :L]
            z = s[:, L:2 * L]
            n = jnp.tanh(gi[:, 2 * L:] + r * (gh[:, 2 * L:] + bhn))
            h = n + z * (h - n)                                            # == (1-z)*n + z*h

        # Lane-dense (B, 256) store: [final hidden (exact) | score broadcast].
        score = jnp.sum(h * fcw, axis=-1, keepdims=True)                   # (B, 1)
        out_ref[:, :L] = h
        out_ref[:, L:] = score + fcb

    return kernel


def recurrent_model_forward(x, slab, hidden=None):
    """Forward pass of RecurrentModel.

    Args:
      x: (B, T, I) float32, batch_first like PyTorch.
      slab: packed parameter slab from prepare_params().
      hidden: optional (1, B, H) initial hidden state.

    Returns:
      (score (B, 1), hidden (1, B, H))
    """
    B, T, I = x.shape
    H = GRU_HIDDEN_SIZE

    # Time-major (T*B, I) rows so the kernel's per-step gi slice is a contiguous
    # static sublane slice. (96 bytes at this size; negligible wrapper cost.)
    x2d = jnp.transpose(x, (1, 0, 2)).reshape(T * B, I).astype(jnp.float32)

    out_shape = jax.ShapeDtypeStruct((B, 2 * LANES), jnp.float32)

    if hidden is None:
        out = pl.pallas_call(
            _make_gru_kernel(T, B, has_h0=False),
            out_shape=out_shape,
            in_specs=[_VMEM, _VMEM],
            out_specs=_VMEM,
        )(x2d, slab)
    else:
        h0 = jnp.zeros((B, LANES), jnp.float32).at[:, :H].set(
            hidden.reshape(B, H).astype(jnp.float32))
        out = pl.pallas_call(
            _make_gru_kernel(T, B, has_h0=True),
            out_shape=out_shape,
            in_specs=[_VMEM, _VMEM, _VMEM],
            out_specs=_VMEM,
        )(x2d, h0, slab)

    score = out[:, LANES:LANES + 1]
    h_final = out[:, :H]
    return score, h_final.reshape(1, B, H)


# ----------------------------------------------------------------------------
# Pure-JAX reference (for self-check only).
# ----------------------------------------------------------------------------
def _reference_forward(x, params, hidden=None):
    B, T, I = x.shape
    H = params["weight_hh"].shape[1]
    w_ih, w_hh = params["weight_ih"], params["weight_hh"]
    b_ih, b_hh = params["bias_ih"], params["bias_hh"]
    h = jnp.zeros((B, H), jnp.float32) if hidden is None else hidden.reshape(B, H)
    for t in range(T):
        x_t = x[:, t, :]
        gi = x_t @ w_ih.T + b_ih
        gh = h @ w_hh.T + b_hh
        i_r, i_z, i_n = gi[:, :H], gi[:, H:2 * H], gi[:, 2 * H:]
        h_r, h_z, h_n = gh[:, :H], gh[:, H:2 * H], gh[:, 2 * H:]
        r = jax.nn.sigmoid(i_r + h_r)
        z = jax.nn.sigmoid(i_z + h_z)
        n = jnp.tanh(i_n + r * h_n)
        h = (1.0 - z) * n + z * h
    score = h @ params["fc_w"].T + params["fc_b"]
    return score, h.reshape(1, B, H)


def init_params(key, input_size, hidden_size):
    """Deterministic init mimicking PyTorch's U(-1/sqrt(H), 1/sqrt(H))."""
    k = 1.0 / jnp.sqrt(hidden_size)
    ks = jax.random.split(key, 6)
    uni = lambda kk, shape: jax.random.uniform(kk, shape, jnp.float32, -k, k)
    return {
        "weight_ih": uni(ks[0], (3 * hidden_size, input_size)),
        "weight_hh": uni(ks[1], (3 * hidden_size, hidden_size)),
        "bias_ih": uni(ks[2], (3 * hidden_size,)),
        "bias_hh": uni(ks[3], (3 * hidden_size,)),
        "fc_w": uni(ks[4], (1, hidden_size)),
        "fc_b": uni(ks[5], (1,)),
    }


if __name__ == "__main__":
    key = jax.random.PRNGKey(0)
    k_param, k_x, k_h = jax.random.split(key, 3)

    batch = 2
    seq_len = 2  # cue step then candidate-stimulus step
    params = init_params(k_param, INPUT_SIZE, GRU_HIDDEN_SIZE)
    slab = jax.block_until_ready(prepare_params(params))  # one-time fusion
    x = jax.random.normal(k_x, (batch, seq_len, INPUT_SIZE), jnp.float32)

    # Default path: no initial hidden (kernel has only 2 operands).
    score, hidden = recurrent_model_forward(x, slab)
    score = jax.block_until_ready(score)
    hidden = jax.block_until_ready(hidden)

    score_ref, hidden_ref = _reference_forward(x, params)
    assert score.shape == (batch, 1)
    assert hidden.shape == (1, batch, GRU_HIDDEN_SIZE)
    assert jnp.allclose(score, score_ref, atol=1e-5, rtol=1e-5)
    assert jnp.allclose(hidden, hidden_ref, atol=1e-5, rtol=1e-5)

    # Explicit initial-hidden path.
    h0 = 0.1 * jax.random.normal(k_h, (1, batch, GRU_HIDDEN_SIZE), jnp.float32)
    score2, hidden2 = recurrent_model_forward(x, slab, hidden=h0)
    score2 = jax.block_until_ready(score2)
    hidden2 = jax.block_until_ready(hidden2)
    score2_ref, hidden2_ref = _reference_forward(x, params, hidden=h0)
    assert jnp.allclose(score2, score2_ref, atol=1e-5, rtol=1e-5)
    assert jnp.allclose(hidden2, hidden2_ref, atol=1e-5, rtol=1e-5)

    print("KERNEL_OK")
</pallas_src>

<mosaic_0001>
module attributes {stable_mosaic.version = 11 : i64} {
  func.func @kernel(%arg0: memref<4x6xf32, #tpu.memory_space<vmem>>, %arg1: memref<144x384xf32, #tpu.memory_space<vmem>>, %arg2: memref<2x256xf32, #tpu.memory_space<vmem>>) attributes {dimension_semantics = [], scalar_prefetch = 0 : i64, scratch_operands = 0 : i64, tpu.core_type = #tpu.core_type<tc>} {
    %cst = arith.constant 0.000000e+00 : f32
    %0 = vector.broadcast %cst : f32 to vector<2x128xf32>
    %c0 = arith.constant 0 : index
    %c0_0 = arith.constant 0 : index
    %1 = vector.load %arg1[%c0, %c0_0] : memref<144x384xf32, #tpu.memory_space<vmem>>, vector<6x384xf32>
    %c6 = arith.constant 6 : index
    %c0_1 = arith.constant 0 : index
    %2 = vector.load %arg1[%c6, %c0_1] : memref<144x384xf32, #tpu.memory_space<vmem>>, vector<1x384xf32>
    %c7 = arith.constant 7 : index
    %c256 = arith.constant 256 : index
    %3 = vector.load %arg1[%c7, %c256] : memref<144x384xf32, #tpu.memory_space<vmem>>, vector<1x128xf32>
    %c8 = arith.constant 8 : index
    %c0_2 = arith.constant 0 : index
    %4 = vector.load %arg1[%c8, %c0_2] : memref<144x384xf32, #tpu.memory_space<vmem>>, vector<128x384xf32>
    %c136 = arith.constant 136 : index
    %c0_3 = arith.constant 0 : index
    %5 = vector.load %arg1[%c136, %c0_3] : memref<144x384xf32, #tpu.memory_space<vmem>>, vector<1x128xf32>
    %c137 = arith.constant 137 : index
    %c0_4 = arith.constant 0 : index
    %6 = vector.load %arg1[%c137, %c0_4] : memref<144x384xf32, #tpu.memory_space<vmem>>, vector<1x128xf32>
    %c0_5 = arith.constant 0 : index
    %c0_6 = arith.constant 0 : index
    %7 = vector.load %arg0[%c0_5, %c0_6] : memref<4x6xf32, #tpu.memory_space<vmem>>, vector<4x6xf32>
    %cst_7 = arith.constant dense<0.000000e+00> : vector<4x384xf32>
    %8 = tpu.matmul %7, %1, %cst_7 {dimension_numbers = #tpu.dot_dimension_numbers<[1], [0], [0], [1], [0, 0, 1, 1], [], []>} : vector<4x6xf32>, vector<6x384xf32>, vector<4x384xf32> -> vector<4x384xf32>
    %9 = vector.broadcast %2 : vector<1x384xf32> to vector<4x384xf32>
    %10 = arith.addf %8, %9 : vector<4x384xf32>
    %11 = vector.extract_strided_slice %10 {offsets = [0, 0], sizes = [2, 384], strides = [1, 1]} : vector<4x384xf32> to vector<2x384xf32>
    %cst_8 = arith.constant dense<0.000000e+00> : vector<2x384xf32>
    %12 = tpu.matmul %0, %4, %cst_8 {dimension_numbers = #tpu.dot_dimension_numbers<[1], [0], [0], [1], [0, 0, 1, 1], [], []>} : vector<2x128xf32>, vector<128x384xf32>, vector<2x384xf32> -> vector<2x384xf32>
    %13 = vector.extract_strided_slice %11 {offsets = [0, 0], sizes = [2, 256], strides = [1, 1]} : vector<2x384xf32> to vector<2x256xf32>
    %14 = vector.extract_strided_slice %12 {offsets = [0, 0], sizes = [2, 256], strides = [1, 1]} : vector<2x384xf32> to vector<2x256xf32>
    %15 = arith.addf %13, %14 : vector<2x256xf32>
    %16 = arith.negf %15 : vector<2x256xf32>
    %17 = math.exp %16 : vector<2x256xf32>
    %cst_9 = arith.constant 1.000000e+00 : f32
    %18 = vector.broadcast %cst_9 : f32 to vector<2x256xf32>
    %19 = arith.addf %18, %17 : vector<2x256xf32>
    %20 = arith.divf %18, %19 : vector<2x256xf32>
    %21 = vector.extract_strided_slice %20 {offsets = [0, 0], sizes = [2, 128], strides = [1, 1]} : vector<2x256xf32> to vector<2x128xf32>
    %22 = vector.extract_strided_slice %20 {offsets = [0, 128], sizes = [2, 128], strides = [1, 1]} : vector<2x256xf32> to vector<2x128xf32>
    %23 = vector.extract_strided_slice %11 {offsets = [0, 256], sizes = [2, 128], strides = [1, 1]} : vector<2x384xf32> to vector<2x128xf32>
    %24 = vector.extract_strided_slice %12 {offsets = [0, 256], sizes = [2, 128], strides = [1, 1]} : vector<2x384xf32> to vector<2x128xf32>
    %25 = vector.broadcast %3 : vector<1x128xf32> to vector<2x128xf32>
    %26 = arith.addf %24, %25 : vector<2x128xf32>
    %27 = arith.mulf %21, %26 : vector<2x128xf32>
    %28 = arith.addf %23, %27 : vector<2x128xf32>
    %29 = math.tanh %28 : vector<2x128xf32>
    %30 = arith.subf %0, %29 : vector<2x128xf32>
    %31 = arith.mulf %22, %30 : vector<2x128xf32>
    %32 = arith.addf %29, %31 : vector<2x128xf32>
    %33 = vector.extract_strided_slice %10 {offsets = [2, 0], sizes = [2, 384], strides = [1, 1]} : vector<4x384xf32> to vector<2x384xf32>
    %cst_10 = arith.constant dense<0.000000e+00> : vector<2x384xf32>
    %34 = tpu.matmul %32, %4, %cst_10 {dimension_numbers = #tpu.dot_dimension_numbers<[1], [0], [0], [1], [0, 0, 1, 1], [], []>} : vector<2x128xf32>, vector<128x384xf32>, vector<2x384xf32> -> vector<2x384xf32>
    %35 = vector.extract_strided_slice %33 {offsets = [0, 0], sizes = [2, 256], strides = [1, 1]} : vector<2x384xf32> to vector<2x256xf32>
    %36 = vector.extract_strided_slice %34 {offsets = [0, 0], sizes = [2, 256], strides = [1, 1]} : vector<2x384xf32> to vector<2x256xf32>
    %37 = arith.addf %35, %36 : vector<2x256xf32>
    %38 = arith.negf %37 : vector<2x256xf32>
    %39 = math.exp %38 : vector<2x256xf32>
    %cst_11 = arith.constant 1.000000e+00 : f32
    %40 = vector.broadcast %cst_11 : f32 to vector<2x256xf32>
    %41 = arith.addf %40, %39 : vector<2x256xf32>
    %42 = arith.divf %40, %41 : vector<2x256xf32>
    %43 = vector.extract_strided_slice %42 {offsets = [0, 0], sizes = [2, 128], strides = [1, 1]} : vector<2x256xf32> to vector<2x128xf32>
    %44 = vector.extract_strided_slice %42 {offsets = [0, 128], sizes = [2, 128], strides = [1, 1]} : vector<2x256xf32> to vector<2x128xf32>
    %45 = vector.extract_strided_slice %33 {offsets = [0, 256], sizes = [2, 128], strides = [1, 1]} : vector<2x384xf32> to vector<2x128xf32>
    %46 = vector.extract_strided_slice %34 {offsets = [0, 256], sizes = [2, 128], strides = [1, 1]} : vector<2x384xf32> to vector<2x128xf32>
    %47 = vector.broadcast %3 : vector<1x128xf32> to vector<2x128xf32>
    %48 = arith.addf %46, %47 : vector<2x128xf32>
    %49 = arith.mulf %43, %48 : vector<2x128xf32>
    %50 = arith.addf %45, %49 : vector<2x128xf32>
    %51 = math.tanh %50 : vector<2x128xf32>
    %52 = arith.subf %32, %51 : vector<2x128xf32>
    %53 = arith.mulf %44, %52 : vector<2x128xf32>
    %54 = arith.addf %51, %53 : vector<2x128xf32>
    %55 = vector.broadcast %5 : vector<1x128xf32> to vector<2x128xf32>
    %56 = arith.mulf %54, %55 : vector<2x128xf32>
    %cst_12 = arith.constant dense<0.000000e+00> : vector<2xf32>
    %57 = vector.multi_reduction <add>, %56, %cst_12 [1] : vector<2x128xf32> to vector<2xf32>
    %58 = vector.shape_cast %57 : vector<2xf32> to vector<2x1xf32>
    %c0_13 = arith.constant 0 : index
    %c0_14 = arith.constant 0 : index
    %59 = vector.load %arg2[%c0_13, %c0_14] : memref<2x256xf32, #tpu.memory_space<vmem>>, vector<2x128xf32>
    tpu.vector_store %arg2[%c0_13, %c0_14], %54 {strides = array<i32>} : memref<2x256xf32, #tpu.memory_space<vmem>>, vector<2x128xf32>,
    %60 = vector.broadcast %58 : vector<2x1xf32> to vector<2x128xf32>
    %61 = vector.broadcast %6 : vector<1x128xf32> to vector<2x128xf32>
    %62 = arith.addf %60, %61 : vector<2x128xf32>
    %c0_15 = arith.constant 0 : index
    %c128 = arith.constant 128 : index
    %63 = vector.load %arg2[%c0_15, %c128] : memref<2x256xf32, #tpu.memory_space<vmem>>, vector<2x128xf32>
    tpu.vector_store %arg2[%c0_15, %c128], %62 {strides = array<i32>} : memref<2x256xf32, #tpu.memory_space<vmem>>, vector<2x128xf32>,
    return
  }
}

</mosaic_0001>

<llo_original>
// kernel: tpu_custom_call.1
$region0: #{tpu_custom_call.1}
  #allocation0 [shape = 'u32[]', space=smem, size = 0x4, offset = 0x4, fixed_abs, tag = 'smem constant byte address 0x4 - core index']
  #allocation1 [shape = 'u32[144,128]{1,0:T(1,128)}', space=vmem, size = 0x12000, scoped, tag = 'internal scratch']
  %s0 = inlined_call_operand.hbm [shape: f32[4,6], index: 0, kind: input, shape index: {}]
  %s1 = inlined_call_operand.hbm [shape: f32[144,384], index: 1, kind: input, shape index: {}]
  %s2 = inlined_call_operand.hbm [shape: f32[2,256], index: 2, kind: output, shape index: {}]
  %s3 = sld [smem:[#allocation0]]
  $region26: #{tpu_custom_call.1} parent=0
    _
  %s5 = ssub.s32 1, %s3
  %s6 = scalar_select 0, %s5, %s3
  $region1: #{tpu_custom_call.1} parent=0
    #allocation2 [shape = 'u8[2048]{0}', space=vmem, size = 0x800, scoped, tag = 'input window, operand 0, single buffered']
    #allocation3 [shape = 's32[1]{0}', space=sflag, size = 0x4, scoped, tag = 'scoped memory for tpu_custom_call.1']
    #allocation4 [shape = 's32[1]{0}', space=sflag, size = 0x4, scoped, tag = 'scoped memory for tpu_custom_call.1']
    #allocation5 [shape = 'u8[221184]{0}', space=vmem, size = 0x36000, scoped, tag = 'input window, operand 1, single buffered']
    #allocation6 [shape = 's32[1]{0}', space=sflag, size = 0x4, scoped, tag = 'scoped memory for tpu_custom_call.1']
    #allocation7 [shape = 'u8[2048]{0}', space=vmem, size = 0x800, scoped, tag = 'output window, operand 0, single buffered']
    %7 = vsyncpa [#allocation3], 0
    %8 = vsyncpa [#allocation6], 0
    %9 = vsyncpa [#allocation4], 0
    // Predicated region
    $region2: #{tpu_custom_call.1} parent=1 // pred_check
      _
    $region3: #{tpu_custom_call.1} parent=1 // pred_check_branch
      %11 = sbr.rel (0) target = $region5
    $region4: #{tpu_custom_call.1} parent=1 // pred_region
      %s13 = ssub.s32 64, 64
      %14 = vsyncadd [#allocation3], %s13
      %s16 = sshll.u32 [#allocation2], 4
      %s17 = int_to_ptr.vmem [resolvable:$true] %s16
      %19 = dma.hbm_to_vmem [thread:$0]  %s0, 64, %s17, [#allocation3]
    $region5: #{tpu_custom_call.1} parent=1 // pred_fallthru
      _
    // Predicated region
    $region6: #{tpu_custom_call.1} parent=1 // pred_check
      _
    $region7: #{tpu_custom_call.1} parent=1 // pred_check_branch
      %21 = sbr.rel (0) target = $region9
    $region8: #{tpu_custom_call.1} parent=1 // pred_region
      %s23 = ssub.s32 6912, 6912
      %24 = vsyncadd [#allocation6], %s23
      %s25 = sshll.u32 [#allocation5], 4
      %s26 = int_to_ptr.vmem [resolvable:$true] %s25
      %31 = dma.hbm_to_vmem [thread:$0]  %s1, 6912, %s26, [#allocation6], 384, 384, 24
    $region9: #{tpu_custom_call.1} parent=1 // pred_fallthru
      _
    // Predicated region
    $region10: #{tpu_custom_call.1} parent=1 // pred_check
      _
    $region11: #{tpu_custom_call.1} parent=1 // pred_check_branch
      %33 = sbr.rel (0) target = $region13
    $region12: #{tpu_custom_call.1} parent=1 // pred_region
      %34 = dma.done [#allocation3], 64
    $region13: #{tpu_custom_call.1} parent=1 // pred_fallthru
      _
    // Predicated region
    $region14: #{tpu_custom_call.1} parent=1 // pred_check
      _
    $region15: #{tpu_custom_call.1} parent=1 // pred_check_branch
      %36 = sbr.rel (0) target = $region17
    $region16: #{tpu_custom_call.1} parent=1 // pred_region
      %37 = dma.done [#allocation6], 6912
    $region17: #{tpu_custom_call.1} parent=1 // pred_fallthru
      _
    %v38 = vld [vmem:[#allocation5] sm:$0x3f]
    %v39 = vld [vmem:[#allocation5 + $0x8] sm:$0x3f]
    %v40 = vld [vmem:[#allocation5 + $0x10] sm:$0x3f]
    %s41 = scalar_lea.vmem [#allocation5], 6
    %v42 = vld [vmem:[%s41] ss:$8 sm:$0x7]
    %v43 = vld [vmem:[#allocation5 + $0x17] ss:$0 sm:$0xff]
    %v44 = vld [vmem:[#allocation5 + $0x18] sm:$0xff]
    %v45 = vld [vmem:[#allocation5 + $0x20] sm:$0xff]
    %v46 = vld [vmem:[#allocation5 + $0x28] sm:$0xff]
    %v47 = vld [vmem:[#allocation5 + $0x30] sm:$0xff]
    %v48 = vld [vmem:[#allocation5 + $0x38] sm:$0xff]
    %v49 = vld [vmem:[#allocation5 + $0x40] sm:$0xff]
    %v50 = vld [vmem:[#allocation5 + $0x48] sm:$0xff]
    %v51 = vld [vmem:[#allocation5 + $0x50] sm:$0xff]
    %v52 = vld [vmem:[#allocation5 + $0x58] sm:$0xff]
    %v53 = vld [vmem:[#allocation5 + $0x60] sm:$0xff]
    %v54 = vld [vmem:[#allocation5 + $0x68] sm:$0xff]
    %v55 = vld [vmem:[#allocation5 + $0x70] sm:$0xff]
    %v56 = vld [vmem:[#allocation5 + $0x78] sm:$0xff]
    %v57 = vld [vmem:[#allocation5 + $0x80] sm:$0xff]
    %v58 = vld [vmem:[#allocation5 + $0x88] sm:$0xff]
    %v59 = vld [vmem:[#allocation5 + $0x90] sm:$0xff]
    %v60 = vld [vmem:[#allocation5 + $0x98] sm:$0xff]
    %v61 = vld [vmem:[#allocation5 + $0xa0] sm:$0xff]
    %v62 = vld [vmem:[#allocation5 + $0xa8] sm:$0xff]
    %v63 = vld [vmem:[#allocation5 + $0xb0] sm:$0xff]
    %v64 = vld [vmem:[#allocation5 + $0xb8] sm:$0xff]
    %v65 = vld [vmem:[#allocation5 + $0xc0] sm:$0xff]
    %v66 = vld [vmem:[#allocation5 + $0xc8] sm:$0xff]
    %v67 = vld [vmem:[#allocation5 + $0xd0] sm:$0xff]
    %v68 = vld [vmem:[#allocation5 + $0xd8] sm:$0xff]
    %v69 = vld [vmem:[#allocation5 + $0xe0] sm:$0xff]
    %v70 = vld [vmem:[#allocation5 + $0xe8] sm:$0xff]
    %v71 = vld [vmem:[#allocation5 + $0xf0] sm:$0xff]
    %v72 = vld [vmem:[#allocation5 + $0xf8] sm:$0xff]
    %v73 = vld [vmem:[#allocation5 + $0x100] sm:$0xff]
    %v74 = vld [vmem:[#allocation5 + $0x108] sm:$0xff]
    %v75 = vld [vmem:[#allocation5 + $0x110] sm:$0xff]
    %v76 = vld [vmem:[#allocation5 + $0x118] sm:$0xff]
    %v77 = vld [vmem:[#allocation5 + $0x120] sm:$0xff]
    %v78 = vld [vmem:[#allocation5 + $0x128] sm:$0xff]
    %v79 = vld [vmem:[#allocation5 + $0x130] sm:$0xff]
    %v80 = vld [vmem:[#allocation5 + $0x138] sm:$0xff]
    %v81 = vld [vmem:[#allocation5 + $0x140] sm:$0xff]
    %v82 = vld [vmem:[#allocation5 + $0x148] sm:$0xff]
    %v83 = vld [vmem:[#allocation5 + $0x150] sm:$0xff]
    %v84 = vld [vmem:[#allocation5 + $0x158] sm:$0xff]
    %v85 = vld [vmem:[#allocation5 + $0x160] sm:$0xff]
    %v86 = vld [vmem:[#allocation5 + $0x168] sm:$0xff]
    %v87 = vld [vmem:[#allocation5 + $0x170] sm:$0xff]
    %v88 = vld [vmem:[#allocation5 + $0x178] sm:$0xff]
    %v89 = vld [vmem:[#allocation5 + $0x180] sm:$0xff]
    %v90 = vld [vmem:[#allocation5 + $0x188] sm:$0xff]
    %v91 = vld [vmem:[#allocation5 + $0x190] sm:$0xff]
    %v92 = vld [vmem:[#allocation5 + $0x198] ss:$0 sm:$0xff]
    %v93 = vld [vmem:[#allocation5 + $0x199] ss:$0 sm:$0xff]
    %v94 = vld [vmem:[#allocation2] sm:$0xf]
    %v96 = vlaneseq
    %v97 = vshrl.u32 %v96, 7
    %v98 = vsub.s32 0, %v97
    %v99 = vrot.slane %v42, %v98
    %v100 = vlaneseq
    %v101 = vshrl.u32 %v100, 7
    %v102 = vsub.s32 1, %v101
    %v103 = vrot.slane %v42, %v102
    %v104 = vlaneseq
    %v105 = vshrl.u32 %v104, 7
    %v106 = vsub.s32 2, %v105
    %v107 = vrot.slane %v42, %v106
    %vm111 = vcmask 48128
    %v113 = vsel %vm111, %v94, 0
    %vm115 = vcmask 1045504
    %v117 = vsel %vm115, %v38, 0
    %v120 = vsel %vm115, %v39, 0
    %v123 = vsel %vm115, %v40, 0
    %125 = vmatprep.subr.mxu0 %v120
    %126 = vmatpush1.msra.mxu0 %v117
    %127 = vmatprep.subr.mxu0 0.0
    %128 = vmatpush1.msra.mxu0 0.0
    %129 = vmatprep.subr.mxu0 0.0
    %130 = vmatpush1.msra.mxu0 0.0
    %131 = vmatprep.subr.mxu0 0.0
    %132 = vmatpush1.msra.mxu0 0.0
    %133 = vmatprep.subr.mxu0 0.0
    %134 = vmatpush1.msra.mxu0 0.0
    %135 = vmatprep.subr.mxu0 0.0
    %136 = vmatpush1.msra.mxu0 0.0
    %137 = vmatprep.subr.mxu0 0.0
    %138 = vmatpush1.msra.mxu0 0.0
    %139 = vmatprep.subr.mxu0 0.0
    %140 = vmatpush1.msra.mxu0 0.0
    %141 = vmatprep.subr.mxu0 0.0
    %142 = vmatpush1.msra.mxu0 0.0
    %143 = vmatprep.subr.mxu0 0.0
    %144 = vmatpush1.msra.mxu0 0.0
    %145 = vmatprep.subr.mxu0 0.0
    %146 = vmatpush1.msra.mxu0 0.0
    %147 = vmatprep.subr.mxu0 0.0
    %148 = vmatpush1.msra.mxu0 0.0
    %149 = vmatprep.subr.mxu0 0.0
    %150 = vmatpush1.msra.mxu0 0.0
    %151 = vmatprep.subr.mxu0 0.0
    %152 = vmatpush1.msra.mxu0 0.0
    %153 = vmatprep.subr.mxu0 0.0
    %154 = vmatpush1.msra.mxu0 0.0
    %155 = vmatprep.subr.mxu0 0.0
    %156 = vmatpush1.msra.mxu0 0.0
    %157 = vmatprep.subr.mxu0 0.0
    %158 = vmatpush1.msra.mxu0 0.0
    %159 = vmatprep.subr.mxu0 0.0
    %160 = vmatpush1.msra.mxu0 0.0
    %161 = vmatprep.subr.mxu0 0.0
    %162 = vmatpush1.msra.mxu0 0.0
    %163 = vmatprep.subr.mxu0 0.0
    %164 = vmatpush1.msra.mxu0 0.0
    %165 = vmatprep.subr.mxu0 0.0
    %166 = vmatpush1.msra.mxu0 0.0
    %167 = vmatprep.subr.mxu0 0.0
    %168 = vmatpush1.msra.mxu0 0.0
    %169 = vmatprep.subr.mxu0 0.0
    %170 = vmatpush1.msra.mxu0 0.0
    %171 = vmatprep.subr.mxu0 0.0
    %172 = vmatpush1.msra.mxu0 0.0
    %173 = vmatprep.subr.mxu0 0.0
    %174 = vmatpush1.msra.mxu0 0.0
    %175 = vmatprep.subr.mxu0 0.0
    %176 = vmatpush1.msra.mxu0 0.0
    %177 = vmatprep.subr.mxu0 0.0
    %178 = vmatpush1.msra.mxu0 0.0
    %179 = vmatprep.subr.mxu0 0.0
    %180 = vmatpush1.msra.mxu0 0.0
    %181 = vmatprep.subr.mxu0 0.0
    %182 = vmatpush1.msra.mxu0 0.0
    %183 = vmatprep.subr.mxu0 0.0
    %184 = vmatpush1.msra.mxu0 0.0
    %185 = vmatprep.subr.mxu0 0.0
    %186 = vmatpush1.msra.mxu0 0.0
    %187 = vmatprep.subr.mxu0 0.0
    %188 = vmatpush1.msra.mxu0 0.0
    %189 = vmatprep.mubr.f32.mxu0 0.0
    %190 = vmatmul.mubr.f32.gmra.mrb[0].mxu0 %v113
    %v191 = vpop.f32.mrb[0].mxu0
    %v192 = vadd.f32 %v99, %v191
    %v193 = vpop.f32.mrb[0].mxu0
    %v194 = vadd.f32 %v103, %v193
    %195 = vdwg.mxu0
    %196 = vmatprep.subr.mxu0 0.0
    %197 = vmatpush1.msra.mxu0 %v123
    %198 = vmatprep.subr.mxu0 0.0
    %199 = vmatpush1.msra.mxu0 0.0
    %200 = vmatprep.subr.mxu0 0.0
    %201 = vmatpush1.msra.mxu0 0.0
    %202 = vmatprep.subr.mxu0 0.0
    %203 = vmatpush1.msra.mxu0 0.0
    %204 = vmatprep.subr.mxu0 0.0
    %205 = vmatpush1.msra.mxu0 0.0
    %206 = vmatprep.subr.mxu0 0.0
    %207 = vmatpush1.msra.mxu0 0.0
    %208 = vmatprep.subr.mxu0 0.0
    %209 = vmatpush1.msra.mxu0 0.0
    %210 = vmatprep.subr.mxu0 0.0
    %211 = vmatpush1.msra.mxu0 0.0
    %212 = vmatprep.subr.mxu0 0.0
    %213 = vmatpush1.msra.mxu0 0.0
    %214 = vmatprep.subr.mxu0 0.0
    %215 = vmatpush1.msra.mxu0 0.0
    %216 = vmatprep.subr.mxu0 0.0
    %217 = vmatpush1.msra.mxu0 0.0
    %218 = vmatprep.subr.mxu0 0.0
    %219 = vmatpush1.msra.mxu0 0.0
    %220 = vmatprep.subr.mxu0 0.0
    %221 = vmatpush1.msra.mxu0 0.0
    %222 = vmatprep.subr.mxu0 0.0
    %223 = vmatpush1.msra.mxu0 0.0
    %224 = vmatprep.subr.mxu0 0.0
    %225 = vmatpush1.msra.mxu0 0.0
    %226 = vmatprep.subr.mxu0 0.0
    %227 = vmatpush1.msra.mxu0 0.0
    %228 = vmatprep.subr.mxu0 0.0
    %229 = vmatpush1.msra.mxu0 0.0
    %230 = vmatprep.subr.mxu0 0.0
    %231 = vmatpush1.msra.mxu0 0.0
    %232 = vmatprep.subr.mxu0 0.0
    %233 = vmatpush1.msra.mxu0 0.0
    %234 = vmatprep.subr.mxu0 0.0
    %235 = vmatpush1.msra.mxu0 0.0
    %236 = vmatprep.subr.mxu0 0.0
    %237 = vmatpush1.msra.mxu0 0.0
    %238 = vmatprep.subr.mxu0 0.0
    %239 = vmatpush1.msra.mxu0 0.0
    %240 = vmatprep.subr.mxu0 0.0
    %241 = vmatpush1.msra.mxu0 0.0
    %242 = vmatprep.subr.mxu0 0.0
    %243 = vmatpush1.msra.mxu0 0.0
    %244 = vmatprep.subr.mxu0 0.0
    %245 = vmatpush1.msra.mxu0 0.0
    %246 = vmatprep.subr.mxu0 0.0
    %247 = vmatpush1.msra.mxu0 0.0
    %248 = vmatprep.subr.mxu0 0.0
    %249 = vmatpush1.msra.mxu0 0.0
    %250 = vmatprep.subr.mxu0 0.0
    %251 = vmatpush1.msra.mxu0 0.0
    %252 = vmatprep.subr.mxu0 0.0
    %253 = vmatpush1.msra.mxu0 0.0
    %254 = vmatprep.subr.mxu0 0.0
    %255 = vmatpush1.msra.mxu0 0.0
    %256 = vmatprep.subr.mxu0 0.0
    %257 = vmatpush1.msra.mxu0 0.0
    %258 = vmatprep.subr.mxu0 0.0
    %259 = vmatpush1.msra.mxu0 0.0
    %260 = vmatprep.mubr.f32.mxu0 0.0
    %261 = vmatmul.mubr.f32.gmra.mrb[0].mxu0 %v113
    %v262 = vpop.f32.mrb[0].mxu0
    %v263 = vadd.f32 %v107, %v262
    %v264 = vpop.f32.mrb[0].mxu0
    %265 = vdwg.mxu0
    %266 = vmatprep.subr.mxu0 %v45
    %267 = vmatpush1.msra.mxu0 %v44
    %268 = vmatprep.subr.mxu0 %v48
    %269 = vmatpush1.msra.mxu0 %v47
    %270 = vmatprep.subr.mxu0 %v51
    %271 = vmatpush1.msra.mxu0 %v50
    %272 = vmatprep.subr.mxu0 %v54
    %273 = vmatpush1.msra.mxu0 %v53
    %274 = vmatprep.subr.mxu0 %v57
    %275 = vmatpush1.msra.mxu0 %v56
    %276 = vmatprep.subr.mxu0 %v60
    %277 = vmatpush1.msra.mxu0 %v59
    %278 = vmatprep.subr.mxu0 %v63
    %279 = vmatpush1.msra.mxu0 %v62
    %280 = vmatprep.subr.mxu0 %v66
    %281 = vmatpush1.msra.mxu0 %v65
    %282 = vmatprep.subr.mxu0 %v69
    %283 = vmatpush1.msra.mxu0 %v68
    %284 = vmatprep.subr.mxu0 %v72
    %285 = vmatpush1.msra.mxu0 %v71
    %286 = vmatprep.subr.mxu0 %v75
    %287 = vmatpush1.msra.mxu0 %v74
    %288 = vmatprep.subr.mxu0 %v78
    %289 = vmatpush1.msra.mxu0 %v77
    %290 = vmatprep.subr.mxu0 %v81
    %291 = vmatpush1.msra.mxu0 %v80
    %292 = vmatprep.subr.mxu0 %v84
    %293 = vmatpush1.msra.mxu0 %v83
    %294 = vmatprep.subr.mxu0 %v87
    %295 = vmatpush1.msra.mxu0 %v86
    %296 = vmatprep.subr.mxu0 %v90
    %297 = vmatpush1.msra.mxu0 %v89
    %298 = vmatprep.subr.mxu0 0.0
    %299 = vmatpush1.msra.mxu0 0.0
    %300 = vmatprep.subr.mxu0 0.0
    %301 = vmatpush1.msra.mxu0 0.0
    %302 = vmatprep.subr.mxu0 0.0
    %303 = vmatpush1.msra.mxu0 0.0
    %304 = vmatprep.subr.mxu0 0.0
    %305 = vmatpush1.msra.mxu0 0.0
    %306 = vmatprep.subr.mxu0 0.0
    %307 = vmatpush1.msra.mxu0 0.0
    %308 = vmatprep.subr.mxu0 0.0
    %309 = vmatpush1.msra.mxu0 0.0
    %310 = vmatprep.subr.mxu0 0.0
    %311 = vmatpush1.msra.mxu0 0.0
    %312 = vmatprep.subr.mxu0 0.0
    %313 = vmatpush1.msra.mxu0 0.0
    %314 = vmatprep.subr.mxu0 0.0
    %315 = vmatpush1.msra.mxu0 0.0
    %316 = vmatprep.subr.mxu0 0.0
    %317 = vmatpush1.msra.mxu0 0.0
    %318 = vmatprep.subr.mxu0 0.0
    %319 = vmatpush1.msra.mxu0 0.0
    %320 = vmatprep.subr.mxu0 0.0
    %321 = vmatpush1.msra.mxu0 0.0
    %322 = vmatprep.subr.mxu0 0.0
    %323 = vmatpush1.msra.mxu0 0.0
    %324 = vmatprep.subr.mxu0 0.0
    %325 = vmatpush1.msra.mxu0 0.0
    %326 = vmatprep.subr.mxu0 0.0
    %327 = vmatpush1.msra.mxu0 0.0
    %328 = vmatprep.subr.mxu0 0.0
    %329 = vmatpush1.msra.mxu0 0.0
    %330 = vmatprep.mubr.f32.mxu0 0.0
    %331 = vmatmul.mubr.f32.gmra.mrb[0].mxu0 0.0
    %v332 = vpop.f32.mrb[0].mxu0
    %v333 = vadd.f32 0.0, %v332
    %v334 = vpop.f32.mrb[0].mxu0
    %v335 = vadd.f32 0.0, %v334
    %336 = vdwg.mxu0
    %337 = vmatprep.subr.mxu0 0.0
    %338 = vmatpush1.msra.mxu0 %v46
    %339 = vmatprep.subr.mxu0 0.0
    %340 = vmatpush1.msra.mxu0 %v49
    %341 = vmatprep.subr.mxu0 0.0
    %342 = vmatpush1.msra.mxu0 %v52
    %343 = vmatprep.subr.mxu0 0.0
    %344 = vmatpush1.msra.mxu0 %v55
    %345 = vmatprep.subr.mxu0 0.0
    %346 = vmatpush1.msra.mxu0 %v58
    %347 = vmatprep.subr.mxu0 0.0
    %348 = vmatpush1.msra.mxu0 %v61
    %349 = vmatprep.subr.mxu0 0.0
    %350 = vmatpush1.msra.mxu0 %v64
    %351 = vmatprep.subr.mxu0 0.0
    %352 = vmatpush1.msra.mxu0 %v67
    %353 = vmatprep.subr.mxu0 0.0
    %354 = vmatpush1.msra.mxu0 %v70
    %355 = vmatprep.subr.mxu0 0.0
    %356 = vmatpush1.msra.mxu0 %v73
    %357 = vmatprep.subr.mxu0 0.0
    %358 = vmatpush1.msra.mxu0 %v76
    %359 = vmatprep.subr.mxu0 0.0
    %360 = vmatpush1.msra.mxu0 %v79
    %361 = vmatprep.subr.mxu0 0.0
    %362 = vmatpush1.msra.mxu0 %v82
    %363 = vmatprep.subr.mxu0 0.0
    %364 = vmatpush1.msra.mxu0 %v85
    %365 = vmatprep.subr.mxu0 0.0
    %366 = vmatpush1.msra.mxu0 %v88
    %367 = vmatprep.subr.mxu0 0.0
    %368 = vmatpush1.msra.mxu0 %v91
    %369 = vmatprep.subr.mxu0 0.0
    %370 = vmatpush1.msra.mxu0 0.0
    %371 = vmatprep.subr.mxu0 0.0
    %372 = vmatpush1.msra.mxu0 0.0
    %373 = vmatprep.subr.mxu0 0.0
    %374 = vmatpush1.msra.mxu0 0.0
    %375 = vmatprep.subr.mxu0 0.0
    %376 = vmatpush1.msra.mxu0 0.0
    %377 = vmatprep.subr.mxu0 0.0
    %378 = vmatpush1.msra.mxu0 0.0
    %379 = vmatprep.subr.mxu0 0.0
    %380 = vmatpush1.msra.mxu0 0.0
    %381 = vmatprep.subr.mxu0 0.0
    %382 = vmatpush1.msra.mxu0 0.0
    %383 = vmatprep.subr.mxu0 0.0
    %384 = vmatpush1.msra.mxu0 0.0
    %385 = vmatprep.subr.mxu0 0.0
    %386 = vmatpush1.msra.mxu0 0.0
    %387 = vmatprep.subr.mxu0 0.0
    %388 = vmatpush1.msra.mxu0 0.0
    %389 = vmatprep.subr.mxu0 0.0
    %390 = vmatpush1.msra.mxu0 0.0
    %391 = vmatprep.subr.mxu0 0.0
    %392 = vmatpush1.msra.mxu0 0.0
    %393 = vmatprep.subr.mxu0 0.0
    %394 = vmatpush1.msra.mxu0 0.0
    %395 = vmatprep.subr.mxu0 0.0
    %396 = vmatpush1.msra.mxu0 0.0
    %397 = vmatprep.subr.mxu0 0.0
    %398 = vmatpush1.msra.mxu0 0.0
    %399 = vmatprep.subr.mxu0 0.0
    %400 = vmatpush1.msra.mxu0 0.0
    %401 = vmatprep.mubr.f32.mxu0 0.0
    %402 = vmatmul.mubr.f32.gmra.mrb[0].mxu0 0.0
    %v403 = vpop.f32.mrb[0].mxu0
    %v404 = vadd.f32 0.0, %v403
    %v405 = vpop.f32.mrb[0].mxu0
    %406 = vdwg.mxu0
    %v407 = vadd.f32 %v192, %v333
    %v408 = vadd.f32 %v194, %v335
    %v409 = vxor.u32 %v407, 2147483648
    %v410 = vxor.u32 %v408, 2147483648
    %v411 = vmul.f32 %v409, 1.442695
    %v412 = vpow.pop %v411
    %v413 = vmul.f32 %v410, 1.442695
    %v414 = vpow.pop %v413
    %v415 = vadd.f32 %v412, 1.0
    %v416 = vadd.f32 %v414, 1.0
    %v417 = vrcp.pop %v415
    %v418 = vmul.f32 1.0, %v417
    %v419 = vrcp.pop %v416
    %v420 = vmul.f32 1.0, %v419
    %v421 = vadd.f32 %v404, %v43
    %v422 = vmul.f32 %v418, %v421
    %v423 = vadd.f32 %v263, %v422
    %v424 = vtanh.pop %v423
    %v425 = vsub.f32 0.0, %v424
    %v426 = vmul.f32 %v420, %v425
    %v427 = vadd.f32 %v424, %v426
    %428 = vmatprep.subr.mxu0 %v45
    %429 = vmatpush1.msra.mxu0 %v44
    %430 = vmatprep.subr.mxu0 %v48
    %431 = vmatpush1.msra.mxu0 %v47
    %432 = vmatprep.subr.mxu0 %v51
    %433 = vmatpush1.msra.mxu0 %v50
    %434 = vmatprep.subr.mxu0 %v54
    %435 = vmatpush1.msra.mxu0 %v53
    %436 = vmatprep.subr.mxu0 %v57
    %437 = vmatpush1.msra.mxu0 %v56
    %438 = vmatprep.subr.mxu0 %v60
    %439 = vmatpush1.msra.mxu0 %v59
    %440 = vmatprep.subr.mxu0 %v63
    %441 = vmatpush1.msra.mxu0 %v62
    %442 = vmatprep.subr.mxu0 %v66
    %443 = vmatpush1.msra.mxu0 %v65
    %444 = vmatprep.subr.mxu0 %v69
    %445 = vmatpush1.msra.mxu0 %v68
    %446 = vmatprep.subr.mxu0 %v72
    %447 = vmatpush1.msra.mxu0 %v71
    %448 = vmatprep.subr.mxu0 %v75
    %449 = vmatpush1.msra.mxu0 %v74
    %450 = vmatprep.subr.mxu0 %v78
    %451 = vmatpush1.msra.mxu0 %v77
    %452 = vmatprep.subr.mxu0 %v81
    %453 = vmatpush1.msra.mxu0 %v80
    %454 = vmatprep.subr.mxu0 %v84
    %455 = vmatpush1.msra.mxu0 %v83
    %456 = vmatprep.subr.mxu0 %v87
    %457 = vmatpush1.msra.mxu0 %v86
    %458 = vmatprep.subr.mxu0 %v90
    %459 = vmatpush1.msra.mxu0 %v89
    %460 = vmatprep.subr.mxu0 0.0
    %461 = vmatpush1.msra.mxu0 0.0
    %462 = vmatprep.subr.mxu0 0.0
    %463 = vmatpush1.msra.mxu0 0.0
    %464 = vmatprep.subr.mxu0 0.0
    %465 = vmatpush1.msra.mxu0 0.0
    %466 = vmatprep.subr.mxu0 0.0
    %467 = vmatpush1.msra.mxu0 0.0
    %468 = vmatprep.subr.mxu0 0.0
    %469 = vmatpush1.msra.mxu0 0.0
    %470 = vmatprep.subr.mxu0 0.0
    %471 = vmatpush1.msra.mxu0 0.0
    %472 = vmatprep.subr.mxu0 0.0
    %473 = vmatpush1.msra.mxu0 0.0
    %474 = vmatprep.subr.mxu0 0.0
    %475 = vmatpush1.msra.mxu0 0.0
    %476 = vmatprep.subr.mxu0 0.0
    %477 = vmatpush1.msra.mxu0 0.0
    %478 = vmatprep.subr.mxu0 0.0
    %479 = vmatpush1.msra.mxu0 0.0
    %480 = vmatprep.subr.mxu0 0.0
    %481 = vmatpush1.msra.mxu0 0.0
    %482 = vmatprep.subr.mxu0 0.0
    %483 = vmatpush1.msra.mxu0 0.0
    %484 = vmatprep.subr.mxu0 0.0
    %485 = vmatpush1.msra.mxu0 0.0
    %486 = vmatprep.subr.mxu0 0.0
    %487 = vmatpush1.msra.mxu0 0.0
    %488 = vmatprep.subr.mxu0 0.0
    %489 = vmatpush1.msra.mxu0 0.0
    %490 = vmatprep.subr.mxu0 0.0
    %491 = vmatpush1.msra.mxu0 0.0
    %492 = vmatprep.mubr.f32.mxu0 0.0
    %493 = vmatmul.mubr.f32.gmra.mrb[0].mxu0 %v427
    %v494 = vpop.f32.mrb[0].mxu0
    %v495 = vadd.f32 0.0, %v494
    %v496 = vpop.f32.mrb[0].mxu0
    %v497 = vadd.f32 0.0, %v496
    %498 = vdwg.mxu0
    %499 = vmatprep.subr.mxu0 0.0
    %500 = vmatpush1.msra.mxu0 %v46
    %501 = vmatprep.subr.mxu0 0.0
    %502 = vmatpush1.msra.mxu0 %v49
    %503 = vmatprep.subr.mxu0 0.0
    %504 = vmatpush1.msra.mxu0 %v52
    %505 = vmatprep.subr.mxu0 0.0
    %506 = vmatpush1.msra.mxu0 %v55
    %507 = vmatprep.subr.mxu0 0.0
    %508 = vmatpush1.msra.mxu0 %v58
    %509 = vmatprep.subr.mxu0 0.0
    %510 = vmatpush1.msra.mxu0 %v61
    %511 = vmatprep.subr.mxu0 0.0
    %512 = vmatpush1.msra.mxu0 %v64
    %513 = vmatprep.subr.mxu0 0.0
    %514 = vmatpush1.msra.mxu0 %v67
    %515 = vmatprep.subr.mxu0 0.0
    %516 = vmatpush1.msra.mxu0 %v70
    %517 = vmatprep.subr.mxu0 0.0
    %518 = vmatpush1.msra.mxu0 %v73
    %519 = vmatprep.subr.mxu0 0.0
    %520 = vmatpush1.msra.mxu0 %v76
    %521 = vmatprep.subr.mxu0 0.0
    %522 = vmatpush1.msra.mxu0 %v79
    %523 = vmatprep.subr.mxu0 0.0
    %524 = vmatpush1.msra.mxu0 %v82
    %525 = vmatprep.subr.mxu0 0.0
    %526 = vmatpush1.msra.mxu0 %v85
    %527 = vmatprep.subr.mxu0 0.0
    %528 = vmatpush1.msra.mxu0 %v88
    %529 = vmatprep.subr.mxu0 0.0
    %530 = vmatpush1.msra.mxu0 %v91
    %531 = vmatprep.subr.mxu0 0.0
    %532 = vmatpush1.msra.mxu0 0.0
    %533 = vmatprep.subr.mxu0 0.0
    %534 = vmatpush1.msra.mxu0 0.0
    %535 = vmatprep.subr.mxu0 0.0
    %536 = vmatpush1.msra.mxu0 0.0
    %537 = vmatprep.subr.mxu0 0.0
    %538 = vmatpush1.msra.mxu0 0.0
    %539 = vmatprep.subr.mxu0 0.0
    %540 = vmatpush1.msra.mxu0 0.0
    %541 = vmatprep.subr.mxu0 0.0
    %542 = vmatpush1.msra.mxu0 0.0
    %543 = vmatprep.subr.mxu0 0.0
    %544 = vmatpush1.msra.mxu0 0.0
    %545 = vmatprep.subr.mxu0 0.0
    %546 = vmatpush1.msra.mxu0 0.0
    %547 = vmatprep.subr.mxu0 0.0
    %548 = vmatpush1.msra.mxu0 0.0
    %549 = vmatprep.subr.mxu0 0.0
    %550 = vmatpush1.msra.mxu0 0.0
    %551 = vmatprep.subr.mxu0 0.0
    %552 = vmatpush1.msra.mxu0 0.0
    %553 = vmatprep.subr.mxu0 0.0
    %554 = vmatpush1.msra.mxu0 0.0
    %555 = vmatprep.subr.mxu0 0.0
    %556 = vmatpush1.msra.mxu0 0.0
    %557 = vmatprep.subr.mxu0 0.0
    %558 = vmatpush1.msra.mxu0 0.0
    %559 = vmatprep.subr.mxu0 0.0
    %560 = vmatpush1.msra.mxu0 0.0
    %561 = vmatprep.subr.mxu0 0.0
    %562 = vmatpush1.msra.mxu0 0.0
    %563 = vmatprep.mubr.f32.mxu0 0.0
    %564 = vmatmul.mubr.f32.gmra.mrb[0].mxu0 %v427
    %v565 = vpop.f32.mrb[0].mxu0
    %v566 = vadd.f32 0.0, %v565
    %v567 = vpop.f32.mrb[0].mxu0
    %568 = vdwg.mxu0
    %v571 = vrot.slane %v495, 6
    %v572 = vrot.slane %v497, 6
    %v575 = vadd.f32 %v192, %v571
    %v576 = vadd.f32 %v194, %v572
    %v577 = vxor.u32 %v575, 2147483648
    %v578 = vxor.u32 %v576, 2147483648
    %v579 = vmul.f32 %v577, 1.442695
    %v580 = vpow.pop %v579
    %v581 = vmul.f32 %v578, 1.442695
    %v582 = vpow.pop %v581
    %v583 = vadd.f32 %v580, 1.0
    %v584 = vadd.f32 %v582, 1.0
    %v585 = vrcp.pop %v583
    %v586 = vmul.f32 1.0, %v585
    %v587 = vrcp.pop %v584
    %v588 = vmul.f32 1.0, %v587
    %v589 = vadd.f32 %v566, %v43
    %v591 = vrot.slane %v589, 6
    %v593 = vmul.f32 %v586, %v591
    %v594 = vadd.f32 %v263, %v593
    %v595 = vtanh.pop %v594
    %v597 = vrot.slane %v595, 2
    %v599 = vsub.f32 %v427, %v597
    %v601 = vrot.slane %v599, 6
    %v603 = vmul.f32 %v588, %v601
    %v604 = vadd.f32 %v595, %v603
    %v605 = vmul.f32 %v604, %v92
    %vm606 = vcmask 1043458
    %v607 = vsel %vm606, %v605, 0.0
    %608 = vadd.xlane.f32.xlu0 %v607
    %v609 = vpop.xlane.xlu0 %608
    %v612 = vunpack.c.l.s4 1983009808
    %v613 = vunpack.c.0.s8 %v612
    %v614 = vlaneseq
    %v615 = vshrl.u32 %v614, 7
    %v616 = vsub.s32 %v613, %v615
    %v617 = vrot.slane %v604, %v616
    %v618 = vcombine.high %v617, %v617
    %620 = vst [vmem:[#allocation7] sm:$0x3] %v618
    %v621 = vadd.f32 %v609, %v93
    %v624 = vunpack.c.l.s4 1983009808
    %v625 = vunpack.c.0.s8 %v624
    %v626 = vlaneseq
    %v627 = vshrl.u32 %v626, 7
    %v628 = vsub.s32 %v625, %v627
    %v629 = vrot.slane %v621, %v628
    %v630 = vcombine.high %v629, %v629
    %632 = vst [vmem:[#allocation7 + $0x2] sm:$0x3] %v630
    // Predicated region
    $region18: #{tpu_custom_call.1} parent=1 // pred_check
      _
    $region19: #{tpu_custom_call.1} parent=1 // pred_check_branch
      %634 = sbr.rel (0) target = $region21
    $region20: #{tpu_custom_call.1} parent=1 // pred_region
      %s636 = ssub.s32 64, 64
      %637 = vsyncadd [#allocation4], %s636
      %s639 = sshll.u32 [#allocation7], 4
      %s640 = int_to_ptr.vmem [resolvable:$true] %s639
      %642 = dma.vmem_to_hbm [thread:$0]  %s640, 64, %s2, [#allocation4]
    $region21: #{tpu_custom_call.1} parent=1 // pred_fallthru
      _
    // Predicated region
    $region22: #{tpu_custom_call.1} parent=1 // pred_check
      _
    $region23: #{tpu_custom_call.1} parent=1 // pred_check_branch
      %644 = sbr.rel (0) target = $region25
    $region24: #{tpu_custom_call.1} parent=1 // pred_region
      %645 = dma.done [#allocation4], 64
    $region25: #{tpu_custom_call.1} parent=1 // pred_fallthru
      _
    %646 = vsyncpa [#allocation3], 1
    %647 = vsyncpa [#allocation6], 1
    %648 = vsyncpa [#allocation4], 1

</llo_original>
